<compile_context>
chip_gen: v6e
topology: v6e:2x2x1
jax: 0.10.0
libtpu: 0.0.40
codegen_flags: <defaults>
</compile_context>

<pallas_src>
import functools

import jax
import jax.numpy as jnp
from jax import lax
from jax.experimental import pallas as pl
from jax.experimental.pallas import tpu as pltpu

_SUBLANE = 8        # f32 sublane tile
_SUB_ROWS = 256     # rows per in-kernel sub-chunk == lane width of output rows
_PREC = lax.Precision.HIGHEST   # true-f32 MXU matmuls (compute is not the bottleneck)


def _round_up(n, m):
    return ((n + m - 1) // m) * m


def _cdiv(a, b):
    return (a + b - 1) // b


# ---------------------------------------------------------------------------
# Kernels.  `sub` / `n_sub` are Python-static (bound via functools.partial).
# Per grid step: x_ref is a (blk, F) tile (blk = n_sub * sub rows), o_ref is an
# (n_sub, sub) lane-dense block; output row j holds the predictions for X rows
# [j*sub, (j+1)*sub) of this tile.
# ---------------------------------------------------------------------------
def _mlp2_kernel(sub, n_sub, x_ref, w1_ref, b1_ref, w2_ref, b2_ref, o_ref):
    w1 = w1_ref[...]        # (F, W)
    b1 = b1_ref[...]        # (1, W)
    w2 = w2_ref[...]        # (1, W)  final-layer weight as a row
    b2 = b2_ref[0]          # scalar  final-layer bias (SMEM)

    def body(j, carry):
        r0 = pl.multiple_of(j * sub, sub)
        x = x_ref[pl.ds(r0, sub), :]                                   # (sub, F)
        h = jnp.dot(x, w1, preferred_element_type=jnp.float32,
                    precision=_PREC) + b1
        h = jnp.maximum(h, 0.0)
        # (1, W) x (sub, W)^T -> (1, sub): result is produced lane-dense.
        o = lax.dot_general(w2, h, (((1,), (1,)), ((), ())),
                            preferred_element_type=jnp.float32,
                            precision=_PREC) + b2
        o_ref[pl.ds(j, 1), :] = o
        return carry

    lax.fori_loop(0, n_sub, body, 0, unroll=(n_sub <= 8))


def _mlp3_kernel(sub, n_sub, x_ref, w1_ref, b1_ref, w2_ref, b2_ref,
                 w3_ref, b3_ref, o_ref):
    w1 = w1_ref[...]        # (F, W//2)
    b1 = b1_ref[...]        # (1, W//2)
    w2 = w2_ref[...]        # (W//2, W)
    b2 = b2_ref[...]        # (1, W)
    w3 = w3_ref[...]        # (1, W)
    b3 = b3_ref[0]          # scalar (SMEM)

    def body(j, carry):
        r0 = pl.multiple_of(j * sub, sub)
        x = x_ref[pl.ds(r0, sub), :]                                   # (sub, F)
        h1 = jnp.maximum(jnp.dot(x, w1, preferred_element_type=jnp.float32,
                                 precision=_PREC) + b1, 0.0)
        h2 = jnp.maximum(jnp.dot(h1, w2, preferred_element_type=jnp.float32,
                                 precision=_PREC) + b2, 0.0)
        o = lax.dot_general(w3, h2, (((1,), (1,)), ((), ())),
                            preferred_element_type=jnp.float32,
                            precision=_PREC) + b3
        o_ref[pl.ds(j, 1), :] = o
        return carry

    lax.fori_loop(0, n_sub, body, 0, unroll=(n_sub <= 8))


# ---------------------------------------------------------------------------
# Wrapper: builds grid / BlockSpecs and calls pallas_call.
# ---------------------------------------------------------------------------
@functools.partial(jax.jit, static_argnames=("block_b",))
def nn_forward(x, params, *, block_b=8192):
    """Fused MLP forward.  `params` is a flat tuple (w1, b1, w2, b2[, w3, b3])
    with weights stored (in_features, out_features)."""
    B, F = x.shape
    x = x.astype(jnp.float32)

    # ---- tile geometry ----------------------------------------------------
    if B <= _SUBLANE * _SUB_ROWS:
        # Small batch: one grid step, one sub-chunk, block == full array (so
        # no (8,128) divisibility questions and no padding at all).
        sub, n_sub, blk, steps = B, 1, B, 1
    else:
        sub = _SUB_ROWS
        quantum = _SUBLANE * sub            # keeps the out-block sublane dim %8
        blk = max(quantum,
                  min(_round_up(block_b, quantum),
                      _round_up(_cdiv(B, 2), quantum)))  # >=2 steps for 2 TCs (v7x)
        blk = min(blk, 64 * 1024)           # cap X buffers at ~4 MiB each
        n_sub = blk // sub
        steps = _cdiv(B, blk)               # ragged tail: Pallas masks the partial block
    n_rows = _cdiv(B, sub)                  # rows of the (n_rows, sub) output slab

    # ---- parameters (f32, weights as (in, out); final layer as a row) -----
    f32 = jnp.float32
    if len(params) == 4:
        w1, b1, w2, b2 = params
        vmem_params = (w1.astype(f32), b1.reshape(1, -1).astype(f32),
                       w2.reshape(1, -1).astype(f32))
        smem_params = (b2.reshape(-1).astype(f32),)
        kern = functools.partial(_mlp2_kernel, sub, n_sub)
    else:
        w1, b1, w2, b2, w3, b3 = params
        vmem_params = (w1.astype(f32), b1.reshape(1, -1).astype(f32),
                       w2.astype(f32), b2.reshape(1, -1).astype(f32),
                       w3.reshape(1, -1).astype(f32))
        smem_params = (b3.reshape(-1).astype(f32),)
        kern = functools.partial(_mlp3_kernel, sub, n_sub)

    x_spec = pl.BlockSpec((blk, F), lambda i: (i, 0))
    vmem_full = pl.BlockSpec(memory_space=pltpu.MemorySpace.VMEM)   # resident weights
    smem_full = pl.BlockSpec(memory_space=pltpu.MemorySpace.SMEM)   # scalar bias
    out_spec = pl.BlockSpec((n_sub, sub), lambda i: (i, 0))

    out = pl.pallas_call(
        kern,
        out_shape=jax.ShapeDtypeStruct((n_rows, sub), jnp.float32),
        grid=(steps,),
        in_specs=[x_spec] + [vmem_full] * len(vmem_params)
                 + [smem_full] * len(smem_params),
        out_specs=out_spec,
        compiler_params=pltpu.CompilerParams(
            dimension_semantics=("parallel",),   # lets v7x shard batch over 2 TCs
        ),
    )(x, *vmem_params, *smem_params)

    # Lane-dense slab -> (B, 1); trailing garbage lanes/rows are sliced off.
    return out.reshape(-1)[:B].reshape(B, 1)


# ---------------------------------------------------------------------------
# Deterministic parameter init (mimics torch.nn.Linear's U(-1/sqrt(fan_in), ..))
# ---------------------------------------------------------------------------
def init_params(key, n_features, width, depth):
    def linear(key, fan_in, fan_out):
        kw, kb = jax.random.split(key)
        bound = 1.0 / jnp.sqrt(fan_in)
        w = jax.random.uniform(kw, (fan_in, fan_out), jnp.float32, -bound, bound)
        b = jax.random.uniform(kb, (1, fan_out), jnp.float32, -bound, bound)
        return w, b

    if depth == 2:
        k1, k2 = jax.random.split(key, 2)
        w1, b1 = linear(k1, n_features, width)
        w2, b2 = linear(k2, width, 1)
        return (w1, b1, w2, b2)
    elif depth == 3:
        k1, k2, k3 = jax.random.split(key, 3)
        w1, b1 = linear(k1, n_features, width // 2)
        w2, b2 = linear(k2, width // 2, width)
        w3, b3 = linear(k3, width, 1)
        return (w1, b1, w2, b2, w3, b3)
    else:
        raise ValueError("depth must be 2 or 3")


# Pure-JAX f32 reference (same precision settings as the kernel).
def nn_reference(x, params):
    if len(params) == 4:
        w1, b1, w2, b2 = params
        h = jnp.maximum(jnp.dot(x, w1, precision=_PREC) + b1.reshape(1, -1), 0.0)
        return jnp.dot(h, w2.reshape(-1, 1), precision=_PREC) + b2.reshape(1, 1)
    w1, b1, w2, b2, w3, b3 = params
    h1 = jnp.maximum(jnp.dot(x, w1, precision=_PREC) + b1.reshape(1, -1), 0.0)
    h2 = jnp.maximum(jnp.dot(h1, w2, precision=_PREC) + b2.reshape(1, -1), 0.0)
    return jnp.dot(h2, w3.reshape(-1, 1), precision=_PREC) + b3.reshape(1, 1)


# TODO(synk): the YAML config loading (get_nn_config) has no Pallas equivalent;
# n_features / width / depth are supplied directly below.
if __name__ == "__main__":
    n_features = 16
    width = 32
    key = jax.random.PRNGKey(0)
    kx1, kx2, kx3, kp2, kp3 = jax.random.split(key, 5)

    # Tiny batch, small ragged batch, and a multi-grid-step batch with a
    # partial (masked) last block.
    cases = [
        jax.random.normal(kx1, (16, n_features), jnp.float32),
        jax.random.normal(kx2, (200, n_features), jnp.float32),
        jax.random.normal(kx3, (4100, n_features), jnp.float32),
    ]

    ok = True
    for depth, kp in ((2, kp2), (3, kp3)):
        params = init_params(kp, n_features, width, depth)
        for x in cases:
            out = jax.block_until_ready(nn_forward(x, params))
            ref = nn_reference(x, params)
            if out.shape != (x.shape[0], 1):
                ok = False
                print(f"shape mismatch depth={depth} B={x.shape[0]}: {out.shape}")
            if not jnp.allclose(out, ref, atol=1e-4, rtol=1e-4):
                ok = False
                err = float(jnp.max(jnp.abs(out - ref)))
                print(f"value mismatch depth={depth} B={x.shape[0]}: max_abs_err={err}")

    if ok:
        print("KERNEL_OK")
</pallas_src>

<mosaic_0001>
module attributes {stable_mosaic.version = 11 : i64} {
  func.func @_mlp2_kernel(%arg0: i32, %arg1: memref<16x16xf32, #tpu.memory_space<vmem>>, %arg2: memref<16x32xf32, #tpu.memory_space<vmem>>, %arg3: memref<1x32xf32, #tpu.memory_space<vmem>>, %arg4: memref<1x32xf32, #tpu.memory_space<vmem>>, %arg5: memref<1xf32, #tpu.memory_space<smem>>, %arg6: memref<1x16xf32, #tpu.memory_space<vmem>>) attributes {dimension_semantics = [#tpu.dimension_semantics<parallel>], iteration_bounds = array<i64: 1>, scalar_prefetch = 0 : i64, scratch_operands = 0 : i64, tpu.core_type = #tpu.core_type<tc>, window_params = [{transform_indices = @transform_0, window_bounds = array<i64: 16, 16>}, {pipeline_mode = #tpu.pipeline_mode<synchronous>, transform_indices = @transform_1, window_bounds = array<i64: 16, 32>}, {pipeline_mode = #tpu.pipeline_mode<synchronous>, transform_indices = @transform_2, window_bounds = array<i64: 1, 32>}, {pipeline_mode = #tpu.pipeline_mode<synchronous>, transform_indices = @transform_3, window_bounds = array<i64: 1, 32>}, {transform_indices = @transform_4, window_bounds = array<i64: 1>}, {transform_indices = @transform_5, window_bounds = array<i64: 1, 16>}]} {
    %c0 = arith.constant 0 : index
    %c0_0 = arith.constant 0 : index
    %0 = vector.load %arg2[%c0, %c0_0] : memref<16x32xf32, #tpu.memory_space<vmem>>, vector<16x32xf32>
    %c0_1 = arith.constant 0 : index
    %c0_2 = arith.constant 0 : index
    %1 = vector.load %arg3[%c0_1, %c0_2] : memref<1x32xf32, #tpu.memory_space<vmem>>, vector<1x32xf32>
    %c0_3 = arith.constant 0 : index
    %c0_4 = arith.constant 0 : index
    %2 = vector.load %arg4[%c0_3, %c0_4] : memref<1x32xf32, #tpu.memory_space<vmem>>, vector<1x32xf32>
    %c0_5 = arith.constant 0 : index
    %3 = memref.load %arg5[%c0_5] : memref<1xf32, #tpu.memory_space<smem>>
    %c0_i32 = arith.constant 0 : i32
    %c16_i32 = arith.constant 16 : i32
    %4 = arith.muli %c0_i32, %c16_i32 : i32
    %5 = tpu.assume_multiple %4, 16 : i32
    %6 = arith.index_cast %5 : i32 to index
    %c0_6 = arith.constant 0 : index
    %7 = vector.load %arg1[%6, %c0_6] : memref<16x16xf32, #tpu.memory_space<vmem>>, vector<16x16xf32>
    %cst = arith.constant dense<0.000000e+00> : vector<16x32xf32>
    %8 = tpu.matmul %7, %0, %cst {dimension_numbers = #tpu.dot_dimension_numbers<[1], [0], [0], [1], [0, 0, 1, 1], [], []>, precision = #tpu.contract_precision<fp32>} : vector<16x16xf32>, vector<16x32xf32>, vector<16x32xf32> -> vector<16x32xf32>
    %9 = vector.broadcast %1 : vector<1x32xf32> to vector<16x32xf32>
    %10 = arith.addf %8, %9 : vector<16x32xf32>
    %cst_7 = arith.constant 0.000000e+00 : f32
    %11 = vector.broadcast %cst_7 : f32 to vector<16x32xf32>
    %12 = arith.maximumf %10, %11 : vector<16x32xf32>
    %cst_8 = arith.constant dense<0.000000e+00> : vector<1x16xf32>
    %13 = tpu.matmul %2, %12, %cst_8 {dimension_numbers = #tpu.dot_dimension_numbers<[1], [1], [0], [0], [0, 0, 1, 0], [], []>, precision = #tpu.contract_precision<fp32>} : vector<1x32xf32>, vector<16x32xf32>, vector<1x16xf32> -> vector<1x16xf32>
    %14 = vector.broadcast %3 : f32 to vector<1x16xf32>
    %15 = arith.addf %13, %14 : vector<1x16xf32>
    %16 = arith.index_cast %c0_i32 : i32 to index
    %c0_9 = arith.constant 0 : index
    %17 = vector.load %arg6[%16, %c0_9] : memref<1x16xf32, #tpu.memory_space<vmem>>, vector<1x16xf32>
    tpu.vector_store %arg6[%16, %c0_9], %15 {strides = array<i32>} : memref<1x16xf32, #tpu.memory_space<vmem>>, vector<1x16xf32>,
    %c1_i32 = arith.constant 1 : i32
    return
  }
  func.func @transform_0(%arg0: i32) -> (i32, i32) {
    %c0_i32 = arith.constant 0 : i32
    %c0_i32_0 = arith.constant 0 : i32
    return %arg0, %c0_i32 : i32, i32
  }
  func.func @transform_1(%arg0: i32) -> (i32, i32) {
    %c0_i32 = arith.constant 0 : i32
    %c0_i32_0 = arith.constant 0 : i32
    %c0_i32_1 = arith.constant 0 : i32
    return %c0_i32, %c0_i32_0 : i32, i32
  }
  func.func @transform_2(%arg0: i32) -> (i32, i32) {
    %c0_i32 = arith.constant 0 : i32
    %c0_i32_0 = arith.constant 0 : i32
    %c0_i32_1 = arith.constant 0 : i32
    return %c0_i32, %c0_i32_0 : i32, i32
  }
  func.func @transform_3(%arg0: i32) -> (i32, i32) {
    %c0_i32 = arith.constant 0 : i32
    %c0_i32_0 = arith.constant 0 : i32
    %c0_i32_1 = arith.constant 0 : i32
    return %c0_i32, %c0_i32_0 : i32, i32
  }
  func.func @transform_4(%arg0: i32) -> i32 {
    %c0_i32 = arith.constant 0 : i32
    %c0_i32_0 = arith.constant 0 : i32
    return %c0_i32 : i32
  }
  func.func @transform_5(%arg0: i32) -> (i32, i32) {
    %c0_i32 = arith.constant 0 : i32
    %c0_i32_0 = arith.constant 0 : i32
    return %arg0, %c0_i32 : i32, i32
  }
}

</mosaic_0001>

<llo_original>
// kernel: nn_forward.1
$region0: #{nn_forward.1}
  #allocation0 [shape = 'u32[]', space=smem, size = 0x4, offset = 0x4, fixed_abs, tag = 'smem constant byte address 0x4 - core index']
  #allocation1 [shape = 'u32[144,128]{1,0:T(1,128)}', space=vmem, size = 0x12000, scoped, tag = 'internal scratch']
  #allocation2 [shape = 'f32[1]{0:T(128)S(6)}', space=smem, size = 0x200, scoped, tag = 'scoped memory for nn_forward.1']
  %s0 = inlined_call_operand.hbm [shape: f32[16,16], index: 0, kind: input, shape index: {}]
  %s1 = inlined_call_operand.hbm [shape: f32[16,32], index: 1, kind: input, shape index: {}]
  %s2 = inlined_call_operand.vmem [shape: f32[1,32], index: 2, kind: input, shape index: {}]
  %s3 = inlined_call_operand.vmem [shape: f32[1,32], index: 3, kind: input, shape index: {}]
  %s4 = inlined_call_operand.<no memory space> [shape: f32[1], index: 4, kind: input, shape index: {}]
  %s5 = inlined_call_operand.hbm [shape: f32[1,16], index: 5, kind: output, shape index: {}]
  %s6 = sld [smem:[#allocation0]]
  $region38: #{nn_forward.1} parent=0
    _
  %s8 = ssub.s32 1, %s6
  %s9 = scalar_select 0, %s8, %s6
  %10 = sst [smem:[#allocation2]] %s4
  $region1: #{nn_forward.1} parent=0
    #allocation3 [shape = 'u8[8192]{0}', space=vmem, size = 0x2000, scoped, tag = 'input window, operand 0, single buffered']
    #allocation4 [shape = 's32[1]{0}', space=sflag, size = 0x4, scoped, tag = 'scoped memory for nn_forward.1']
    #allocation5 [shape = 's32[1]{0}', space=sflag, size = 0x4, scoped, tag = 'scoped memory for nn_forward.1']
    #allocation6 [shape = 'u8[8192]{0}', space=vmem, size = 0x2000, scoped, tag = 'input window, operand 1, single buffered']
    #allocation7 [shape = 's32[1]{0}', space=sflag, size = 0x4, scoped, tag = 'scoped memory for nn_forward.1']
    #allocation8 [shape = 'u8[512]{0}', space=vmem, size = 0x400, scoped, tag = 'output window, operand 0, single buffered']
    %11 = vsyncpa [#allocation4], 0
    %12 = vsyncpa [#allocation7], 0
    %13 = vsyncpa [#allocation5], 0
    // Predicated region
    $region2: #{nn_forward.1} parent=1 // pred_check
      _
    $region3: #{nn_forward.1} parent=1 // pred_check_branch
      %15 = sbr.rel (0) target = $region5
    $region4: #{nn_forward.1} parent=1 // pred_region
      %s17 = ssub.s32 256, 256
      %18 = vsyncadd [#allocation4], %s17
      %s19 = sshll.u32 [#allocation3], 4
      %s20 = int_to_ptr.vmem [resolvable:$true] %s19
      %25 = dma.hbm_to_vmem [thread:$0]  %s0, 256, %s20, [#allocation4], 128, 128, 8
    $region5: #{nn_forward.1} parent=1 // pred_fallthru
      _
    // Predicated region
    $region6: #{nn_forward.1} parent=1 // pred_check
      _
    $region7: #{nn_forward.1} parent=1 // pred_check_branch
      %27 = sbr.rel (0) target = $region9
    $region8: #{nn_forward.1} parent=1 // pred_region
      %s29 = ssub.s32 256, 256
      %30 = vsyncadd [#allocation7], %s29
      %s31 = sshll.u32 [#allocation6], 4
      %s32 = int_to_ptr.vmem [resolvable:$true] %s31
      %37 = dma.hbm_to_vmem [thread:$0]  %s1, 256, %s32, [#allocation7], 128, 128, 8
    $region9: #{nn_forward.1} parent=1 // pred_fallthru
      _
    // Predicated region
    $region10: #{nn_forward.1} parent=1 // pred_check
      _
    $region11: #{nn_forward.1} parent=1 // pred_check_branch
      %39 = sbr.rel (0) target = $region13
    $region12: #{nn_forward.1} parent=1 // pred_region
      _
    $region13: #{nn_forward.1} parent=1 // pred_fallthru
      _
    // Predicated region
    $region14: #{nn_forward.1} parent=1 // pred_check
      _
    $region15: #{nn_forward.1} parent=1 // pred_check_branch
      %41 = sbr.rel (0) target = $region17
    $region16: #{nn_forward.1} parent=1 // pred_region
      _
    $region17: #{nn_forward.1} parent=1 // pred_fallthru
      _
    // Predicated region
    $region18: #{nn_forward.1} parent=1 // pred_check
      _
    $region19: #{nn_forward.1} parent=1 // pred_check_branch
      %43 = sbr.rel (0) target = $region21
    $region20: #{nn_forward.1} parent=1 // pred_region
      _
    $region21: #{nn_forward.1} parent=1 // pred_fallthru
      _
    // Predicated region
    $region22: #{nn_forward.1} parent=1 // pred_check
      _
    $region23: #{nn_forward.1} parent=1 // pred_check_branch
      %45 = sbr.rel (0) target = $region25
    $region24: #{nn_forward.1} parent=1 // pred_region
      %46 = dma.done [#allocation4], 256
    $region25: #{nn_forward.1} parent=1 // pred_fallthru
      _
    // Predicated region
    $region26: #{nn_forward.1} parent=1 // pred_check
      _
    $region27: #{nn_forward.1} parent=1 // pred_check_branch
      %48 = sbr.rel (0) target = $region29
    $region28: #{nn_forward.1} parent=1 // pred_region
      %49 = dma.done [#allocation7], 256
    $region29: #{nn_forward.1} parent=1 // pred_fallthru
      _
    %v50 = vld [vmem:[#allocation6] sm:$0xff]
    %v51 = vld [vmem:[#allocation6 + $0x8] sm:$0xff]
    %v52 = vld [vmem:[%s2] sm:$0x1]
    %v53 = vld [vmem:[%s3] sm:$0x1]
    %s54 = sld [smem:[#allocation2]]
    %v55 = vld [vmem:[#allocation3] sm:$0xff]
    %v56 = vld [vmem:[#allocation3 + $0x8] sm:$0xff]
    %v58 = vlaneseq
    %v59 = vshrl.u32 %v58, 7
    %v60 = vsub.s32 0, %v59
    %v61 = vrot.slane %v52, %v60
    %vm63 = vcmask 130048
    %v65 = vsel %vm63, %v55, 0
    %v68 = vsel %vm63, %v56, 0
    %70 = vmatprep.subr.mxu0 0.0
    %71 = vmatpush1.msra.mxu0 0.0
    %72 = vmatprep.subr.mxu0 0.0
    %73 = vmatpush1.msra.mxu0 0.0
    %74 = vmatprep.subr.mxu0 0.0
    %75 = vmatpush1.msra.mxu0 0.0
    %76 = vmatprep.subr.mxu0 0.0
    %77 = vmatpush1.msra.mxu0 0.0
    %78 = vmatprep.subr.mxu0 0.0
    %79 = vmatpush1.msra.mxu0 0.0
    %80 = vmatprep.subr.mxu0 0.0
    %81 = vmatpush1.msra.mxu0 0.0
    %82 = vmatprep.subr.mxu0 0.0
    %83 = vmatpush1.msra.mxu0 0.0
    %84 = vmatprep.subr.mxu0 0.0
    %85 = vmatpush1.msra.mxu0 0.0
    %86 = vmatprep.subr.mxu0 0.0
    %87 = vmatpush1.msra.mxu0 0.0
    %88 = vmatprep.subr.mxu0 0.0
    %89 = vmatpush1.msra.mxu0 0.0
    %90 = vmatprep.subr.mxu0 0.0
    %91 = vmatpush1.msra.mxu0 0.0
    %92 = vmatprep.subr.mxu0 0.0
    %93 = vmatpush1.msra.mxu0 0.0
    %94 = vmatprep.subr.mxu0 0.0
    %95 = vmatpush1.msra.mxu0 0.0
    %96 = vmatprep.subr.mxu0 0.0
    %97 = vmatpush1.msra.mxu0 0.0
    %98 = vmatprep.subr.mxu0 0.0
    %v99 = vand.u32 %v51, 4294901760
    %100 = vmatpush1.msra.mxu0 %v99
    %101 = vmatprep.subr.mxu0 0.0
    %v102 = vand.u32 %v50, 4294901760
    %103 = vmatpush1.msra.mxu0 %v102
    %104 = vmatprep.subr.mxu0 0.0
    %105 = vmatpush2.msra.mxu0 0.0
    %106 = vmatprep.subr.mxu0 0.0
    %107 = vmatpush2.msra.mxu0 0.0
    %108 = vmatprep.subr.mxu0 0.0
    %109 = vmatpush2.msra.mxu0 0.0
    %110 = vmatprep.subr.mxu0 0.0
    %111 = vmatpush2.msra.mxu0 0.0
    %112 = vmatprep.subr.mxu0 0.0
    %113 = vmatpush2.msra.mxu0 0.0
    %114 = vmatprep.subr.mxu0 0.0
    %115 = vmatpush2.msra.mxu0 0.0
    %116 = vmatprep.subr.mxu0 0.0
    %117 = vmatpush2.msra.mxu0 0.0
    %118 = vmatprep.subr.mxu0 0.0
    %119 = vmatpush2.msra.mxu0 0.0
    %120 = vmatprep.subr.mxu0 0.0
    %121 = vmatpush2.msra.mxu0 0.0
    %122 = vmatprep.subr.mxu0 0.0
    %123 = vmatpush2.msra.mxu0 0.0
    %124 = vmatprep.subr.mxu0 0.0
    %125 = vmatpush2.msra.mxu0 0.0
    %126 = vmatprep.subr.mxu0 0.0
    %127 = vmatpush2.msra.mxu0 0.0
    %128 = vmatprep.subr.mxu0 0.0
    %129 = vmatpush2.msra.mxu0 0.0
    %130 = vmatprep.subr.mxu0 0.0
    %131 = vmatpush2.msra.mxu0 0.0
    %132 = vmatprep.subr.mxu0 0.0
    %133 = vmatpush2.msra.mxu0 0.0
    %134 = vmatprep.subr.mxu0 0.0
    %135 = vmatpush2.msra.mxu0 0.0
    %136 = vmatprep.mubr.f32.mxu0 0.0
    %v137 = vand.u32 %v65, 4294901760
    %v138 = vsub.f32 %v65, %v137
    %v139 = vand.u32 %v138, 4294901760
    %v140 = vsub.f32 %v138, %v139
    %v141 = vand.u32 %v140, 4294901760
    %142 = vmatmul.mubr.f32.gmra.mxu0 %v141
    %v143 = vpop.f32.mrf.mxu0
    %v144 = vadd.f32 %v61, %v143
    %v145 = vpop.f32.mrf.mxu0
    %146 = vmatprep.mubr.f32.mxu0 0.0
    %v147 = vand.u32 %v68, 4294901760
    %v148 = vsub.f32 %v68, %v147
    %v149 = vand.u32 %v148, 4294901760
    %v150 = vsub.f32 %v148, %v149
    %v151 = vand.u32 %v150, 4294901760
    %152 = vmatmul.mubr.f32.gmra.mxu0 %v151
    %v153 = vpop.f32.mrf.mxu0
    %v154 = vadd.f32 %v61, %v153
    %v155 = vpop.f32.mrf.mxu0
    %156 = vdwg.mxu0
    %157 = vmatprep.subr.mxu0 0.0
    %158 = vmatpush1.msra.mxu0 0.0
    %159 = vmatprep.subr.mxu0 0.0
    %160 = vmatpush1.msra.mxu0 0.0
    %161 = vmatprep.subr.mxu0 0.0
    %162 = vmatpush1.msra.mxu0 0.0
    %163 = vmatprep.subr.mxu0 0.0
    %164 = vmatpush1.msra.mxu0 0.0
    %165 = vmatprep.subr.mxu0 0.0
    %166 = vmatpush1.msra.mxu0 0.0
    %167 = vmatprep.subr.mxu0 0.0
    %168 = vmatpush1.msra.mxu0 0.0
    %169 = vmatprep.subr.mxu0 0.0
    %170 = vmatpush1.msra.mxu0 0.0
    %171 = vmatprep.subr.mxu0 0.0
    %172 = vmatpush1.msra.mxu0 0.0
    %173 = vmatprep.subr.mxu0 0.0
    %174 = vmatpush1.msra.mxu0 0.0
    %175 = vmatprep.subr.mxu0 0.0
    %176 = vmatpush1.msra.mxu0 0.0
    %177 = vmatprep.subr.mxu0 0.0
    %178 = vmatpush1.msra.mxu0 0.0
    %179 = vmatprep.subr.mxu0 0.0
    %180 = vmatpush1.msra.mxu0 0.0
    %181 = vmatprep.subr.mxu0 0.0
    %182 = vmatpush1.msra.mxu0 0.0
    %183 = vmatprep.subr.mxu0 0.0
    %184 = vmatpush1.msra.mxu0 0.0
    %185 = vmatprep.subr.mxu0 0.0
    %v186 = vand.u32 %v51, 4294901760
    %v187 = vsub.f32 %v51, %v186
    %v188 = vand.u32 %v187, 4294901760
    %v189 = vsub.f32 %v187, %v188
    %v190 = vand.u32 %v189, 4294901760
    %191 = vmatpush1.msra.mxu0 %v190
    %192 = vmatprep.subr.mxu0 0.0
    %v193 = vand.u32 %v50, 4294901760
    %v194 = vsub.f32 %v50, %v193
    %v195 = vand.u32 %v194, 4294901760
    %v196 = vsub.f32 %v194, %v195
    %v197 = vand.u32 %v196, 4294901760
    %198 = vmatpush1.msra.mxu0 %v197
    %199 = vmatprep.subr.mxu0 0.0
    %200 = vmatpush2.msra.mxu0 0.0
    %201 = vmatprep.subr.mxu0 0.0
    %202 = vmatpush2.msra.mxu0 0.0
    %203 = vmatprep.subr.mxu0 0.0
    %204 = vmatpush2.msra.mxu0 0.0
    %205 = vmatprep.subr.mxu0 0.0
    %206 = vmatpush2.msra.mxu0 0.0
    %207 = vmatprep.subr.mxu0 0.0
    %208 = vmatpush2.msra.mxu0 0.0
    %209 = vmatprep.subr.mxu0 0.0
    %210 = vmatpush2.msra.mxu0 0.0
    %211 = vmatprep.subr.mxu0 0.0
    %212 = vmatpush2.msra.mxu0 0.0
    %213 = vmatprep.subr.mxu0 0.0
    %214 = vmatpush2.msra.mxu0 0.0
    %215 = vmatprep.subr.mxu0 0.0
    %216 = vmatpush2.msra.mxu0 0.0
    %217 = vmatprep.subr.mxu0 0.0
    %218 = vmatpush2.msra.mxu0 0.0
    %219 = vmatprep.subr.mxu0 0.0
    %220 = vmatpush2.msra.mxu0 0.0
    %221 = vmatprep.subr.mxu0 0.0
    %222 = vmatpush2.msra.mxu0 0.0
    %223 = vmatprep.subr.mxu0 0.0
    %224 = vmatpush2.msra.mxu0 0.0
    %225 = vmatprep.subr.mxu0 0.0
    %226 = vmatpush2.msra.mxu0 0.0
    %227 = vmatprep.subr.mxu0 0.0
    %228 = vmatpush2.msra.mxu0 0.0
    %229 = vmatprep.subr.mxu0 0.0
    %230 = vmatpush2.msra.mxu0 0.0
    %231 = vmatprep.mubr.f32.mxu0 0.0
    %v232 = vand.u32 %v65, 4294901760
    %233 = vmatmul.mubr.f32.gmra.mxu0 %v232
    %v234 = vpop.f32.mrf.mxu0
    %v235 = vadd.f32 %v144, %v234
    %v236 = vpop.f32.mrf.mxu0
    %237 = vmatprep.mubr.f32.mxu0 0.0
    %v238 = vand.u32 %v68, 4294901760
    %239 = vmatmul.mubr.f32.gmra.mxu0 %v238
    %v240 = vpop.f32.mrf.mxu0
    %v241 = vadd.f32 %v154, %v240
    %v242 = vpop.f32.mrf.mxu0
    %243 = vdwg.mxu0
    %244 = vmatprep.subr.mxu0 0.0
    %245 = vmatpush1.msra.mxu0 0.0
    %246 = vmatprep.subr.mxu0 0.0
    %247 = vmatpush1.msra.mxu0 0.0
    %248 = vmatprep.subr.mxu0 0.0
    %249 = vmatpush1.msra.mxu0 0.0
    %250 = vmatprep.subr.mxu0 0.0
    %251 = vmatpush1.msra.mxu0 0.0
    %252 = vmatprep.subr.mxu0 0.0
    %253 = vmatpush1.msra.mxu0 0.0
    %254 = vmatprep.subr.mxu0 0.0
    %255 = vmatpush1.msra.mxu0 0.0
    %256 = vmatprep.subr.mxu0 0.0
    %257 = vmatpush1.msra.mxu0 0.0
    %258 = vmatprep.subr.mxu0 0.0
    %259 = vmatpush1.msra.mxu0 0.0
    %260 = vmatprep.subr.mxu0 0.0
    %261 = vmatpush1.msra.mxu0 0.0
    %262 = vmatprep.subr.mxu0 0.0
    %263 = vmatpush1.msra.mxu0 0.0
    %264 = vmatprep.subr.mxu0 0.0
    %265 = vmatpush1.msra.mxu0 0.0
    %266 = vmatprep.subr.mxu0 0.0
    %267 = vmatpush1.msra.mxu0 0.0
    %268 = vmatprep.subr.mxu0 0.0
    %269 = vmatpush1.msra.mxu0 0.0
    %270 = vmatprep.subr.mxu0 0.0
    %271 = vmatpush1.msra.mxu0 0.0
    %272 = vmatprep.subr.mxu0 0.0
    %v273 = vand.u32 %v51, 4294901760
    %v274 = vsub.f32 %v51, %v273
    %275 = vmatpush1.msra.mxu0 %v274
    %276 = vmatprep.subr.mxu0 0.0
    %v277 = vand.u32 %v50, 4294901760
    %v278 = vsub.f32 %v50, %v277
    %279 = vmatpush1.msra.mxu0 %v278
    %280 = vmatprep.subr.mxu0 0.0
    %281 = vmatpush2.msra.mxu0 0.0
    %282 = vmatprep.subr.mxu0 0.0
    %283 = vmatpush2.msra.mxu0 0.0
    %284 = vmatprep.subr.mxu0 0.0
    %285 = vmatpush2.msra.mxu0 0.0
    %286 = vmatprep.subr.mxu0 0.0
    %287 = vmatpush2.msra.mxu0 0.0
    %288 = vmatprep.subr.mxu0 0.0
    %289 = vmatpush2.msra.mxu0 0.0
    %290 = vmatprep.subr.mxu0 0.0
    %291 = vmatpush2.msra.mxu0 0.0
    %292 = vmatprep.subr.mxu0 0.0
    %293 = vmatpush2.msra.mxu0 0.0
    %294 = vmatprep.subr.mxu0 0.0
    %295 = vmatpush2.msra.mxu0 0.0
    %296 = vmatprep.subr.mxu0 0.0
    %297 = vmatpush2.msra.mxu0 0.0
    %298 = vmatprep.subr.mxu0 0.0
    %299 = vmatpush2.msra.mxu0 0.0
    %300 = vmatprep.subr.mxu0 0.0
    %301 = vmatpush2.msra.mxu0 0.0
    %302 = vmatprep.subr.mxu0 0.0
    %303 = vmatpush2.msra.mxu0 0.0
    %304 = vmatprep.subr.mxu0 0.0
    %305 = vmatpush2.msra.mxu0 0.0
    %306 = vmatprep.subr.mxu0 0.0
    %307 = vmatpush2.msra.mxu0 0.0
    %308 = vmatprep.subr.mxu0 0.0
    %309 = vmatpush2.msra.mxu0 0.0
    %310 = vmatprep.subr.mxu0 0.0
    %311 = vmatpush2.msra.mxu0 0.0
    %312 = vmatprep.mubr.f32.mxu0 0.0
    %v313 = vand.u32 %v65, 4294901760
    %v314 = vsub.f32 %v65, %v313
    %315 = vmatmul.mubr.f32.gmra.mxu0 %v314
    %v316 = vpop.f32.mrf.mxu0
    %v317 = vadd.f32 %v235, %v316
    %v318 = vpop.f32.mrf.mxu0
    %319 = vmatprep.mubr.f32.mxu0 0.0
    %v320 = vand.u32 %v68, 4294901760
    %v321 = vsub.f32 %v68, %v320
    %322 = vmatmul.mubr.f32.gmra.mxu0 %v321
    %v323 = vpop.f32.mrf.mxu0
    %v324 = vadd.f32 %v241, %v323
    %v325 = vpop.f32.mrf.mxu0
    %326 = vdwg.mxu0
    %327 = vmatprep.subr.mxu0 0.0
    %328 = vmatpush1.msra.mxu0 0.0
    %329 = vmatprep.subr.mxu0 0.0
    %330 = vmatpush1.msra.mxu0 0.0
    %331 = vmatprep.subr.mxu0 0.0
    %332 = vmatpush1.msra.mxu0 0.0
    %333 = vmatprep.subr.mxu0 0.0
    %334 = vmatpush1.msra.mxu0 0.0
    %335 = vmatprep.subr.mxu0 0.0
    %336 = vmatpush1.msra.mxu0 0.0
    %337 = vmatprep.subr.mxu0 0.0
    %338 = vmatpush1.msra.mxu0 0.0
    %339 = vmatprep.subr.mxu0 0.0
    %340 = vmatpush1.msra.mxu0 0.0
    %341 = vmatprep.subr.mxu0 0.0
    %342 = vmatpush1.msra.mxu0 0.0
    %343 = vmatprep.subr.mxu0 0.0
    %344 = vmatpush1.msra.mxu0 0.0
    %345 = vmatprep.subr.mxu0 0.0
    %346 = vmatpush1.msra.mxu0 0.0
    %347 = vmatprep.subr.mxu0 0.0
    %348 = vmatpush1.msra.mxu0 0.0
    %349 = vmatprep.subr.mxu0 0.0
    %350 = vmatpush1.msra.mxu0 0.0
    %351 = vmatprep.subr.mxu0 0.0
    %352 = vmatpush1.msra.mxu0 0.0
    %353 = vmatprep.subr.mxu0 0.0
    %354 = vmatpush1.msra.mxu0 0.0
    %355 = vmatprep.subr.mxu0 0.0
    %v356 = vand.u32 %v51, 4294901760
    %357 = vmatpush1.msra.mxu0 %v356
    %358 = vmatprep.subr.mxu0 0.0
    %v359 = vand.u32 %v50, 4294901760
    %360 = vmatpush1.msra.mxu0 %v359
    %361 = vmatprep.subr.mxu0 0.0
    %362 = vmatpush2.msra.mxu0 0.0
    %363 = vmatprep.subr.mxu0 0.0
    %364 = vmatpush2.msra.mxu0 0.0
    %365 = vmatprep.subr.mxu0 0.0
    %366 = vmatpush2.msra.mxu0 0.0
    %367 = vmatprep.subr.mxu0 0.0
    %368 = vmatpush2.msra.mxu0 0.0
    %369 = vmatprep.subr.mxu0 0.0
    %370 = vmatpush2.msra.mxu0 0.0
    %371 = vmatprep.subr.mxu0 0.0
    %372 = vmatpush2.msra.mxu0 0.0
    %373 = vmatprep.subr.mxu0 0.0
    %374 = vmatpush2.msra.mxu0 0.0
    %375 = vmatprep.subr.mxu0 0.0
    %376 = vmatpush2.msra.mxu0 0.0
    %377 = vmatprep.subr.mxu0 0.0
    %378 = vmatpush2.msra.mxu0 0.0
    %379 = vmatprep.subr.mxu0 0.0
    %380 = vmatpush2.msra.mxu0 0.0
    %381 = vmatprep.subr.mxu0 0.0
    %382 = vmatpush2.msra.mxu0 0.0
    %383 = vmatprep.subr.mxu0 0.0
    %384 = vmatpush2.msra.mxu0 0.0
    %385 = vmatprep.subr.mxu0 0.0
    %386 = vmatpush2.msra.mxu0 0.0
    %387 = vmatprep.subr.mxu0 0.0
    %388 = vmatpush2.msra.mxu0 0.0
    %389 = vmatprep.subr.mxu0 0.0
    %390 = vmatpush2.msra.mxu0 0.0
    %391 = vmatprep.subr.mxu0 0.0
    %392 = vmatpush2.msra.mxu0 0.0
    %393 = vmatprep.mubr.f32.mxu0 0.0
    %v394 = vand.u32 %v65, 4294901760
    %v395 = vsub.f32 %v65, %v394
    %v396 = vand.u32 %v395, 4294901760
    %397 = vmatmul.mubr.f32.gmra.mxu0 %v396
    %v398 = vpop.f32.mrf.mxu0
    %v399 = vadd.f32 %v317, %v398
    %v400 = vpop.f32.mrf.mxu0
    %401 = vmatprep.mubr.f32.mxu0 0.0
    %v402 = vand.u32 %v68, 4294901760
    %v403 = vsub.f32 %v68, %v402
    %v404 = vand.u32 %v403, 4294901760
    %405 = vmatmul.mubr.f32.gmra.mxu0 %v404
    %v406 = vpop.f32.mrf.mxu0
    %v407 = vadd.f32 %v324, %v406
    %v408 = vpop.f32.mrf.mxu0
    %409 = vdwg.mxu0
    %410 = vmatprep.subr.mxu0 0.0
    %411 = vmatpush1.msra.mxu0 0.0
    %412 = vmatprep.subr.mxu0 0.0
    %413 = vmatpush1.msra.mxu0 0.0
    %414 = vmatprep.subr.mxu0 0.0
    %415 = vmatpush1.msra.mxu0 0.0
    %416 = vmatprep.subr.mxu0 0.0
    %417 = vmatpush1.msra.mxu0 0.0
    %418 = vmatprep.subr.mxu0 0.0
    %419 = vmatpush1.msra.mxu0 0.0
    %420 = vmatprep.subr.mxu0 0.0
    %421 = vmatpush1.msra.mxu0 0.0
    %422 = vmatprep.subr.mxu0 0.0
    %423 = vmatpush1.msra.mxu0 0.0
    %424 = vmatprep.subr.mxu0 0.0
    %425 = vmatpush1.msra.mxu0 0.0
    %426 = vmatprep.subr.mxu0 0.0
    %427 = vmatpush1.msra.mxu0 0.0
    %428 = vmatprep.subr.mxu0 0.0
    %429 = vmatpush1.msra.mxu0 0.0
    %430 = vmatprep.subr.mxu0 0.0
    %431 = vmatpush1.msra.mxu0 0.0
    %432 = vmatprep.subr.mxu0 0.0
    %433 = vmatpush1.msra.mxu0 0.0
    %434 = vmatprep.subr.mxu0 0.0
    %435 = vmatpush1.msra.mxu0 0.0
    %436 = vmatprep.subr.mxu0 0.0
    %437 = vmatpush1.msra.mxu0 0.0
    %438 = vmatprep.subr.mxu0 0.0
    %v439 = vand.u32 %v51, 4294901760
    %v440 = vsub.f32 %v51, %v439
    %v441 = vand.u32 %v440, 4294901760
    %442 = vmatpush1.msra.mxu0 %v441
    %443 = vmatprep.subr.mxu0 0.0
    %v444 = vand.u32 %v50, 4294901760
    %v445 = vsub.f32 %v50, %v444
    %v446 = vand.u32 %v445, 4294901760
    %447 = vmatpush1.msra.mxu0 %v446
    %448 = vmatprep.subr.mxu0 0.0
    %449 = vmatpush2.msra.mxu0 0.0
    %450 = vmatprep.subr.mxu0 0.0
    %451 = vmatpush2.msra.mxu0 0.0
    %452 = vmatprep.subr.mxu0 0.0
    %453 = vmatpush2.msra.mxu0 0.0
    %454 = vmatprep.subr.mxu0 0.0
    %455 = vmatpush2.msra.mxu0 0.0
    %456 = vmatprep.subr.mxu0 0.0
    %457 = vmatpush2.msra.mxu0 0.0
    %458 = vmatprep.subr.mxu0 0.0
    %459 = vmatpush2.msra.mxu0 0.0
    %460 = vmatprep.subr.mxu0 0.0
    %461 = vmatpush2.msra.mxu0 0.0
    %462 = vmatprep.subr.mxu0 0.0
    %463 = vmatpush2.msra.mxu0 0.0
    %464 = vmatprep.subr.mxu0 0.0
    %465 = vmatpush2.msra.mxu0 0.0
    %466 = vmatprep.subr.mxu0 0.0
    %467 = vmatpush2.msra.mxu0 0.0
    %468 = vmatprep.subr.mxu0 0.0
    %469 = vmatpush2.msra.mxu0 0.0
    %470 = vmatprep.subr.mxu0 0.0
    %471 = vmatpush2.msra.mxu0 0.0
    %472 = vmatprep.subr.mxu0 0.0
    %473 = vmatpush2.msra.mxu0 0.0
    %474 = vmatprep.subr.mxu0 0.0
    %475 = vmatpush2.msra.mxu0 0.0
    %476 = vmatprep.subr.mxu0 0.0
    %477 = vmatpush2.msra.mxu0 0.0
    %478 = vmatprep.subr.mxu0 0.0
    %479 = vmatpush2.msra.mxu0 0.0
    %480 = vmatprep.mubr.f32.mxu0 0.0
    %v481 = vand.u32 %v65, 4294901760
    %482 = vmatmul.mubr.f32.gmra.mxu0 %v481
    %v483 = vpop.f32.mrf.mxu0
    %v484 = vadd.f32 %v399, %v483
    %v485 = vpop.f32.mrf.mxu0
    %486 = vmatprep.mubr.f32.mxu0 0.0
    %v487 = vand.u32 %v68, 4294901760
    %488 = vmatmul.mubr.f32.gmra.mxu0 %v487
    %v489 = vpop.f32.mrf.mxu0
    %v490 = vadd.f32 %v407, %v489
    %v491 = vpop.f32.mrf.mxu0
    %492 = vdwg.mxu0
    %493 = vmatprep.subr.mxu0 0.0
    %494 = vmatpush1.msra.mxu0 0.0
    %495 = vmatprep.subr.mxu0 0.0
    %496 = vmatpush1.msra.mxu0 0.0
    %497 = vmatprep.subr.mxu0 0.0
    %498 = vmatpush1.msra.mxu0 0.0
    %499 = vmatprep.subr.mxu0 0.0
    %500 = vmatpush1.msra.mxu0 0.0
    %501 = vmatprep.subr.mxu0 0.0
    %502 = vmatpush1.msra.mxu0 0.0
    %503 = vmatprep.subr.mxu0 0.0
    %504 = vmatpush1.msra.mxu0 0.0
    %505 = vmatprep.subr.mxu0 0.0
    %506 = vmatpush1.msra.mxu0 0.0
    %507 = vmatprep.subr.mxu0 0.0
    %508 = vmatpush1.msra.mxu0 0.0
    %509 = vmatprep.subr.mxu0 0.0
    %510 = vmatpush1.msra.mxu0 0.0
    %511 = vmatprep.subr.mxu0 0.0
    %512 = vmatpush1.msra.mxu0 0.0
    %513 = vmatprep.subr.mxu0 0.0
    %514 = vmatpush1.msra.mxu0 0.0
    %515 = vmatprep.subr.mxu0 0.0
    %516 = vmatpush1.msra.mxu0 0.0
    %517 = vmatprep.subr.mxu0 0.0
    %518 = vmatpush1.msra.mxu0 0.0
    %519 = vmatprep.subr.mxu0 0.0
    %520 = vmatpush1.msra.mxu0 0.0
    %521 = vmatprep.subr.mxu0 0.0
    %v522 = vand.u32 %v51, 4294901760
    %523 = vmatpush1.msra.mxu0 %v522
    %524 = vmatprep.subr.mxu0 0.0
    %v525 = vand.u32 %v50, 4294901760
    %526 = vmatpush1.msra.mxu0 %v525
    %527 = vmatprep.subr.mxu0 0.0
    %528 = vmatpush2.msra.mxu0 0.0
    %529 = vmatprep.subr.mxu0 0.0
    %530 = vmatpush2.msra.mxu0 0.0
    %531 = vmatprep.subr.mxu0 0.0
    %532 = vmatpush2.msra.mxu0 0.0
    %533 = vmatprep.subr.mxu0 0.0
    %534 = vmatpush2.msra.mxu0 0.0
    %535 = vmatprep.subr.mxu0 0.0
    %536 = vmatpush2.msra.mxu0 0.0
    %537 = vmatprep.subr.mxu0 0.0
    %538 = vmatpush2.msra.mxu0 0.0
    %539 = vmatprep.subr.mxu0 0.0
    %540 = vmatpush2.msra.mxu0 0.0
    %541 = vmatprep.subr.mxu0 0.0
    %542 = vmatpush2.msra.mxu0 0.0
    %543 = vmatprep.subr.mxu0 0.0
    %544 = vmatpush2.msra.mxu0 0.0
    %545 = vmatprep.subr.mxu0 0.0
    %546 = vmatpush2.msra.mxu0 0.0
    %547 = vmatprep.subr.mxu0 0.0
    %548 = vmatpush2.msra.mxu0 0.0
    %549 = vmatprep.subr.mxu0 0.0
    %550 = vmatpush2.msra.mxu0 0.0
    %551 = vmatprep.subr.mxu0 0.0
    %552 = vmatpush2.msra.mxu0 0.0
    %553 = vmatprep.subr.mxu0 0.0
    %554 = vmatpush2.msra.mxu0 0.0
    %555 = vmatprep.subr.mxu0 0.0
    %556 = vmatpush2.msra.mxu0 0.0
    %557 = vmatprep.subr.mxu0 0.0
    %558 = vmatpush2.msra.mxu0 0.0
    %559 = vmatprep.mubr.f32.mxu0 0.0
    %v560 = vand.u32 %v65, 4294901760
    %561 = vmatmul.mubr.f32.gmra.mxu0 %v560
    %v562 = vpop.f32.mrf.mxu0
    %v563 = vadd.f32 %v484, %v562
    %v564 = vpop.f32.mrf.mxu0
    %565 = vmatprep.mubr.f32.mxu0 0.0
    %v566 = vand.u32 %v68, 4294901760
    %567 = vmatmul.mubr.f32.gmra.mxu0 %v566
    %v568 = vpop.f32.mrf.mxu0
    %v569 = vadd.f32 %v490, %v568
    %v570 = vpop.f32.mrf.mxu0
    %571 = vdwg.mxu0
    %v572 = vmax.f32 %v563, 0.0
    %v573 = vmax.f32 %v569, 0.0
    %v574 = vstv %s54
    %vm575 = vcmask 261120
    %v577 = vsel %vm575, %v53, 0
    %v580 = vsel %vm575, %v572, 0
    %v583 = vsel %vm575, %v573, 0
    %585 = vmatprep.subr.mxu0 0.0
    %586 = vmatpush1.xpose.msra.mxu0 0.0
    %587 = vmatprep.subr.mxu0 0.0
    %588 = vmatpush1.xpose.msra.mxu0 0.0
    %589 = vmatprep.subr.mxu0 0.0
    %590 = vmatpush1.xpose.msra.mxu0 0.0
    %591 = vmatprep.subr.mxu0 0.0
    %592 = vmatpush1.xpose.msra.mxu0 0.0
    %593 = vmatprep.subr.mxu0 0.0
    %594 = vmatpush1.xpose.msra.mxu0 0.0
    %595 = vmatprep.subr.mxu0 0.0
    %596 = vmatpush1.xpose.msra.mxu0 0.0
    %597 = vmatprep.subr.mxu0 0.0
    %598 = vmatpush1.xpose.msra.mxu0 0.0
    %599 = vmatprep.subr.mxu0 0.0
    %600 = vmatpush1.xpose.msra.mxu0 0.0
    %601 = vmatprep.subr.mxu0 0.0
    %602 = vmatpush1.xpose.msra.mxu0 0.0
    %603 = vmatprep.subr.mxu0 0.0
    %604 = vmatpush1.xpose.msra.mxu0 0.0
    %605 = vmatprep.subr.mxu0 0.0
    %606 = vmatpush1.xpose.msra.mxu0 0.0
    %607 = vmatprep.subr.mxu0 0.0
    %608 = vmatpush1.xpose.msra.mxu0 0.0
    %609 = vmatprep.subr.mxu0 0.0
    %610 = vmatpush1.xpose.msra.mxu0 0.0
    %611 = vmatprep.subr.mxu0 0.0
    %612 = vmatpush1.xpose.msra.mxu0 0.0
    %613 = vmatprep.subr.mxu0 0.0
    %v614 = vand.u32 %v583, 4294901760
    %615 = vmatpush1.xpose.msra.mxu0 %v614
    %616 = vmatprep.subr.mxu0 0.0
    %v617 = vand.u32 %v580, 4294901760
    %618 = vmatpush1.xpose.msra.mxu0 %v617
    %619 = vmatprep.subr.mxu0 0.0
    %620 = vmatpush2.xpose.msra.mxu0 0.0
    %621 = vmatprep.subr.mxu0 0.0
    %622 = vmatpush2.xpose.msra.mxu0 0.0
    %623 = vmatprep.subr.mxu0 0.0
    %624 = vmatpush2.xpose.msra.mxu0 0.0
    %625 = vmatprep.subr.mxu0 0.0
    %626 = vmatpush2.xpose.msra.mxu0 0.0
    %627 = vmatprep.subr.mxu0 0.0
    %628 = vmatpush2.xpose.msra.mxu0 0.0
    %629 = vmatprep.subr.mxu0 0.0
    %630 = vmatpush2.xpose.msra.mxu0 0.0
    %631 = vmatprep.subr.mxu0 0.0
    %632 = vmatpush2.xpose.msra.mxu0 0.0
    %633 = vmatprep.subr.mxu0 0.0
    %634 = vmatpush2.xpose.msra.mxu0 0.0
    %635 = vmatprep.subr.mxu0 0.0
    %636 = vmatpush2.xpose.msra.mxu0 0.0
    %637 = vmatprep.subr.mxu0 0.0
    %638 = vmatpush2.xpose.msra.mxu0 0.0
    %639 = vmatprep.subr.mxu0 0.0
    %640 = vmatpush2.xpose.msra.mxu0 0.0
    %641 = vmatprep.subr.mxu0 0.0
    %642 = vmatpush2.xpose.msra.mxu0 0.0
    %643 = vmatprep.subr.mxu0 0.0
    %644 = vmatpush2.xpose.msra.mxu0 0.0
    %645 = vmatprep.subr.mxu0 0.0
    %646 = vmatpush2.xpose.msra.mxu0 0.0
    %647 = vmatprep.subr.mxu0 0.0
    %648 = vmatpush2.xpose.msra.mxu0 0.0
    %649 = vmatprep.subr.mxu0 0.0
    %650 = vmatpush2.xpose.msra.mxu0 0.0
    %651 = vmatprep.mubr.f32.mxu0 0.0
    %v652 = vand.u32 %v577, 4294901760
    %v653 = vsub.f32 %v577, %v652
    %v654 = vand.u32 %v653, 4294901760
    %v655 = vsub.f32 %v653, %v654
    %v656 = vand.u32 %v655, 4294901760
    %657 = vmatmul.mubr.f32.gmra.mxu0 %v656
    %v658 = vpop.f32.mrf.mxu0
    %v659 = vadd.f32 %v574, %v658
    %v660 = vpop.f32.mrf.mxu0
    %661 = vdwg.mxu0
    %662 = vmatprep.subr.mxu0 0.0
    %663 = vmatpush1.xpose.msra.mxu0 0.0
    %664 = vmatprep.subr.mxu0 0.0
    %665 = vmatpush1.xpose.msra.mxu0 0.0
    %666 = vmatprep.subr.mxu0 0.0
    %667 = vmatpush1.xpose.msra.mxu0 0.0
    %668 = vmatprep.subr.mxu0 0.0
    %669 = vmatpush1.xpose.msra.mxu0 0.0
    %670 = vmatprep.subr.mxu0 0.0
    %671 = vmatpush1.xpose.msra.mxu0 0.0
    %672 = vmatprep.subr.mxu0 0.0
    %673 = vmatpush1.xpose.msra.mxu0 0.0
    %674 = vmatprep.subr.mxu0 0.0
    %675 = vmatpush1.xpose.msra.mxu0 0.0
    %676 = vmatprep.subr.mxu0 0.0
    %677 = vmatpush1.xpose.msra.mxu0 0.0
    %678 = vmatprep.subr.mxu0 0.0
    %679 = vmatpush1.xpose.msra.mxu0 0.0
    %680 = vmatprep.subr.mxu0 0.0
    %681 = vmatpush1.xpose.msra.mxu0 0.0
    %682 = vmatprep.subr.mxu0 0.0
    %683 = vmatpush1.xpose.msra.mxu0 0.0
    %684 = vmatprep.subr.mxu0 0.0
    %685 = vmatpush1.xpose.msra.mxu0 0.0
    %686 = vmatprep.subr.mxu0 0.0
    %687 = vmatpush1.xpose.msra.mxu0 0.0
    %688 = vmatprep.subr.mxu0 0.0
    %689 = vmatpush1.xpose.msra.mxu0 0.0
    %690 = vmatprep.subr.mxu0 0.0
    %v691 = vand.u32 %v583, 4294901760
    %v692 = vsub.f32 %v583, %v691
    %v693 = vand.u32 %v692, 4294901760
    %v694 = vsub.f32 %v692, %v693
    %v695 = vand.u32 %v694, 4294901760
    %696 = vmatpush1.xpose.msra.mxu0 %v695
    %697 = vmatprep.subr.mxu0 0.0
    %v698 = vand.u32 %v580, 4294901760
    %v699 = vsub.f32 %v580, %v698
    %v700 = vand.u32 %v699, 4294901760
    %v701 = vsub.f32 %v699, %v700
    %v702 = vand.u32 %v701, 4294901760
    %703 = vmatpush1.xpose.msra.mxu0 %v702
    %704 = vmatprep.subr.mxu0 0.0
    %705 = vmatpush2.xpose.msra.mxu0 0.0
    %706 = vmatprep.subr.mxu0 0.0
    %707 = vmatpush2.xpose.msra.mxu0 0.0
    %708 = vmatprep.subr.mxu0 0.0
    %709 = vmatpush2.xpose.msra.mxu0 0.0
    %710 = vmatprep.subr.mxu0 0.0
    %711 = vmatpush2.xpose.msra.mxu0 0.0
    %712 = vmatprep.subr.mxu0 0.0
    %713 = vmatpush2.xpose.msra.mxu0 0.0
    %714 = vmatprep.subr.mxu0 0.0
    %715 = vmatpush2.xpose.msra.mxu0 0.0
    %716 = vmatprep.subr.mxu0 0.0
    %717 = vmatpush2.xpose.msra.mxu0 0.0
    %718 = vmatprep.subr.mxu0 0.0
    %719 = vmatpush2.xpose.msra.mxu0 0.0
    %720 = vmatprep.subr.mxu0 0.0
    %721 = vmatpush2.xpose.msra.mxu0 0.0
    %722 = vmatprep.subr.mxu0 0.0
    %723 = vmatpush2.xpose.msra.mxu0 0.0
    %724 = vmatprep.subr.mxu0 0.0
    %725 = vmatpush2.xpose.msra.mxu0 0.0
    %726 = vmatprep.subr.mxu0 0.0
    %727 = vmatpush2.xpose.msra.mxu0 0.0
    %728 = vmatprep.subr.mxu0 0.0
    %729 = vmatpush2.xpose.msra.mxu0 0.0
    %730 = vmatprep.subr.mxu0 0.0
    %731 = vmatpush2.xpose.msra.mxu0 0.0
    %732 = vmatprep.subr.mxu0 0.0
    %733 = vmatpush2.xpose.msra.mxu0 0.0
    %734 = vmatprep.subr.mxu0 0.0
    %735 = vmatpush2.xpose.msra.mxu0 0.0
    %736 = vmatprep.mubr.f32.mxu0 0.0
    %v737 = vand.u32 %v577, 4294901760
    %738 = vmatmul.mubr.f32.gmra.mxu0 %v737
    %v739 = vpop.f32.mrf.mxu0
    %v740 = vadd.f32 %v659, %v739
    %v741 = vpop.f32.mrf.mxu0
    %742 = vdwg.mxu0
    %743 = vmatprep.subr.mxu0 0.0
    %744 = vmatpush1.xpose.msra.mxu0 0.0
    %745 = vmatprep.subr.mxu0 0.0
    %746 = vmatpush1.xpose.msra.mxu0 0.0
    %747 = vmatprep.subr.mxu0 0.0
    %748 = vmatpush1.xpose.msra.mxu0 0.0
    %749 = vmatprep.subr.mxu0 0.0
    %750 = vmatpush1.xpose.msra.mxu0 0.0
    %751 = vmatprep.subr.mxu0 0.0
    %752 = vmatpush1.xpose.msra.mxu0 0.0
    %753 = vmatprep.subr.mxu0 0.0
    %754 = vmatpush1.xpose.msra.mxu0 0.0
    %755 = vmatprep.subr.mxu0 0.0
    %756 = vmatpush1.xpose.msra.mxu0 0.0
    %757 = vmatprep.subr.mxu0 0.0
    %758 = vmatpush1.xpose.msra.mxu0 0.0
    %759 = vmatprep.subr.mxu0 0.0
    %760 = vmatpush1.xpose.msra.mxu0 0.0
    %761 = vmatprep.subr.mxu0 0.0
    %762 = vmatpush1.xpose.msra.mxu0 0.0
    %763 = vmatprep.subr.mxu0 0.0
    %764 = vmatpush1.xpose.msra.mxu0 0.0
    %765 = vmatprep.subr.mxu0 0.0
    %766 = vmatpush1.xpose.msra.mxu0 0.0
    %767 = vmatprep.subr.mxu0 0.0
    %768 = vmatpush1.xpose.msra.mxu0 0.0
    %769 = vmatprep.subr.mxu0 0.0
    %770 = vmatpush1.xpose.msra.mxu0 0.0
    %771 = vmatprep.subr.mxu0 0.0
    %v772 = vand.u32 %v583, 4294901760
    %v773 = vsub.f32 %v583, %v772
    %774 = vmatpush1.xpose.msra.mxu0 %v773
    %775 = vmatprep.subr.mxu0 0.0
    %v776 = vand.u32 %v580, 4294901760
    %v777 = vsub.f32 %v580, %v776
    %778 = vmatpush1.xpose.msra.mxu0 %v777
    %779 = vmatprep.subr.mxu0 0.0
    %780 = vmatpush2.xpose.msra.mxu0 0.0
    %781 = vmatprep.subr.mxu0 0.0
    %782 = vmatpush2.xpose.msra.mxu0 0.0
    %783 = vmatprep.subr.mxu0 0.0
    %784 = vmatpush2.xpose.msra.mxu0 0.0
    %785 = vmatprep.subr.mxu0 0.0
    %786 = vmatpush2.xpose.msra.mxu0 0.0
    %787 = vmatprep.subr.mxu0 0.0
    %788 = vmatpush2.xpose.msra.mxu0 0.0
    %789 = vmatprep.subr.mxu0 0.0
    %790 = vmatpush2.xpose.msra.mxu0 0.0
    %791 = vmatprep.subr.mxu0 0.0
    %792 = vmatpush2.xpose.msra.mxu0 0.0
    %793 = vmatprep.subr.mxu0 0.0
    %794 = vmatpush2.xpose.msra.mxu0 0.0
    %795 = vmatprep.subr.mxu0 0.0
    %796 = vmatpush2.xpose.msra.mxu0 0.0
    %797 = vmatprep.subr.mxu0 0.0
    %798 = vmatpush2.xpose.msra.mxu0 0.0
    %799 = vmatprep.subr.mxu0 0.0
    %800 = vmatpush2.xpose.msra.mxu0 0.0
    %801 = vmatprep.subr.mxu0 0.0
    %802 = vmatpush2.xpose.msra.mxu0 0.0
    %803 = vmatprep.subr.mxu0 0.0
    %804 = vmatpush2.xpose.msra.mxu0 0.0
    %805 = vmatprep.subr.mxu0 0.0
    %806 = vmatpush2.xpose.msra.mxu0 0.0
    %807 = vmatprep.subr.mxu0 0.0
    %808 = vmatpush2.xpose.msra.mxu0 0.0
    %809 = vmatprep.subr.mxu0 0.0
    %810 = vmatpush2.xpose.msra.mxu0 0.0
    %811 = vmatprep.mubr.f32.mxu0 0.0
    %v812 = vand.u32 %v577, 4294901760
    %v813 = vsub.f32 %v577, %v812
    %814 = vmatmul.mubr.f32.gmra.mxu0 %v813
    %v815 = vpop.f32.mrf.mxu0
    %v816 = vadd.f32 %v740, %v815
    %v817 = vpop.f32.mrf.mxu0
    %818 = vdwg.mxu0
    %819 = vmatprep.subr.mxu0 0.0
    %820 = vmatpush1.xpose.msra.mxu0 0.0
    %821 = vmatprep.subr.mxu0 0.0
    %822 = vmatpush1.xpose.msra.mxu0 0.0
    %823 = vmatprep.subr.mxu0 0.0
    %824 = vmatpush1.xpose.msra.mxu0 0.0
    %825 = vmatprep.subr.mxu0 0.0
    %826 = vmatpush1.xpose.msra.mxu0 0.0
    %827 = vmatprep.subr.mxu0 0.0
    %828 = vmatpush1.xpose.msra.mxu0 0.0
    %829 = vmatprep.subr.mxu0 0.0
    %830 = vmatpush1.xpose.msra.mxu0 0.0
    %831 = vmatprep.subr.mxu0 0.0
    %832 = vmatpush1.xpose.msra.mxu0 0.0
    %833 = vmatprep.subr.mxu0 0.0
    %834 = vmatpush1.xpose.msra.mxu0 0.0
    %835 = vmatprep.subr.mxu0 0.0
    %836 = vmatpush1.xpose.msra.mxu0 0.0
    %837 = vmatprep.subr.mxu0 0.0
    %838 = vmatpush1.xpose.msra.mxu0 0.0
    %839 = vmatprep.subr.mxu0 0.0
    %840 = vmatpush1.xpose.msra.mxu0 0.0
    %841 = vmatprep.subr.mxu0 0.0
    %842 = vmatpush1.xpose.msra.mxu0 0.0
    %843 = vmatprep.subr.mxu0 0.0
    %844 = vmatpush1.xpose.msra.mxu0 0.0
    %845 = vmatprep.subr.mxu0 0.0
    %846 = vmatpush1.xpose.msra.mxu0 0.0
    %847 = vmatprep.subr.mxu0 0.0
    %v848 = vand.u32 %v583, 4294901760
    %849 = vmatpush1.xpose.msra.mxu0 %v848
    %850 = vmatprep.subr.mxu0 0.0
    %v851 = vand.u32 %v580, 4294901760
    %852 = vmatpush1.xpose.msra.mxu0 %v851
    %853 = vmatprep.subr.mxu0 0.0
    %854 = vmatpush2.xpose.msra.mxu0 0.0
    %855 = vmatprep.subr.mxu0 0.0
    %856 = vmatpush2.xpose.msra.mxu0 0.0
    %857 = vmatprep.subr.mxu0 0.0
    %858 = vmatpush2.xpose.msra.mxu0 0.0
    %859 = vmatprep.subr.mxu0 0.0
    %860 = vmatpush2.xpose.msra.mxu0 0.0
    %861 = vmatprep.subr.mxu0 0.0
    %862 = vmatpush2.xpose.msra.mxu0 0.0
    %863 = vmatprep.subr.mxu0 0.0
    %864 = vmatpush2.xpose.msra.mxu0 0.0
    %865 = vmatprep.subr.mxu0 0.0
    %866 = vmatpush2.xpose.msra.mxu0 0.0
    %867 = vmatprep.subr.mxu0 0.0
    %868 = vmatpush2.xpose.msra.mxu0 0.0
    %869 = vmatprep.subr.mxu0 0.0
    %870 = vmatpush2.xpose.msra.mxu0 0.0
    %871 = vmatprep.subr.mxu0 0.0
    %872 = vmatpush2.xpose.msra.mxu0 0.0
    %873 = vmatprep.subr.mxu0 0.0
    %874 = vmatpush2.xpose.msra.mxu0 0.0
    %875 = vmatprep.subr.mxu0 0.0
    %876 = vmatpush2.xpose.msra.mxu0 0.0
    %877 = vmatprep.subr.mxu0 0.0
    %878 = vmatpush2.xpose.msra.mxu0 0.0
    %879 = vmatprep.subr.mxu0 0.0
    %880 = vmatpush2.xpose.msra.mxu0 0.0
    %881 = vmatprep.subr.mxu0 0.0
    %882 = vmatpush2.xpose.msra.mxu0 0.0
    %883 = vmatprep.subr.mxu0 0.0
    %884 = vmatpush2.xpose.msra.mxu0 0.0
    %885 = vmatprep.mubr.f32.mxu0 0.0
    %v886 = vand.u32 %v577, 4294901760
    %v887 = vsub.f32 %v577, %v886
    %v888 = vand.u32 %v887, 4294901760
    %889 = vmatmul.mubr.f32.gmra.mxu0 %v888
    %v890 = vpop.f32.mrf.mxu0
    %v891 = vadd.f32 %v816, %v890
    %v892 = vpop.f32.mrf.mxu0
    %893 = vdwg.mxu0
    %894 = vmatprep.subr.mxu0 0.0
    %895 = vmatpush1.xpose.msra.mxu0 0.0
    %896 = vmatprep.subr.mxu0 0.0
    %897 = vmatpush1.xpose.msra.mxu0 0.0
    %898 = vmatprep.subr.mxu0 0.0
    %899 = vmatpush1.xpose.msra.mxu0 0.0
    %900 = vmatprep.subr.mxu0 0.0
    %901 = vmatpush1.xpose.msra.mxu0 0.0
    %902 = vmatprep.subr.mxu0 0.0
    %903 = vmatpush1.xpose.msra.mxu0 0.0
    %904 = vmatprep.subr.mxu0 0.0
    %905 = vmatpush1.xpose.msra.mxu0 0.0
    %906 = vmatprep.subr.mxu0 0.0
    %907 = vmatpush1.xpose.msra.mxu0 0.0
    %908 = vmatprep.subr.mxu0 0.0
    %909 = vmatpush1.xpose.msra.mxu0 0.0
    %910 = vmatprep.subr.mxu0 0.0
    %911 = vmatpush1.xpose.msra.mxu0 0.0
    %912 = vmatprep.subr.mxu0 0.0
    %913 = vmatpush1.xpose.msra.mxu0 0.0
    %914 = vmatprep.subr.mxu0 0.0
    %915 = vmatpush1.xpose.msra.mxu0 0.0
    %916 = vmatprep.subr.mxu0 0.0
    %917 = vmatpush1.xpose.msra.mxu0 0.0
    %918 = vmatprep.subr.mxu0 0.0
    %919 = vmatpush1.xpose.msra.mxu0 0.0
    %920 = vmatprep.subr.mxu0 0.0
    %921 = vmatpush1.xpose.msra.mxu0 0.0
    %922 = vmatprep.subr.mxu0 0.0
    %v923 = vand.u32 %v583, 4294901760
    %v924 = vsub.f32 %v583, %v923
    %v925 = vand.u32 %v924, 4294901760
    %926 = vmatpush1.xpose.msra.mxu0 %v925
    %927 = vmatprep.subr.mxu0 0.0
    %v928 = vand.u32 %v580, 4294901760
    %v929 = vsub.f32 %v580, %v928
    %v930 = vand.u32 %v929, 4294901760
    %931 = vmatpush1.xpose.msra.mxu0 %v930
    %932 = vmatprep.subr.mxu0 0.0
    %933 = vmatpush2.xpose.msra.mxu0 0.0
    %934 = vmatprep.subr.mxu0 0.0
    %935 = vmatpush2.xpose.msra.mxu0 0.0
    %936 = vmatprep.subr.mxu0 0.0
    %937 = vmatpush2.xpose.msra.mxu0 0.0
    %938 = vmatprep.subr.mxu0 0.0
    %939 = vmatpush2.xpose.msra.mxu0 0.0
    %940 = vmatprep.subr.mxu0 0.0
    %941 = vmatpush2.xpose.msra.mxu0 0.0
    %942 = vmatprep.subr.mxu0 0.0
    %943 = vmatpush2.xpose.msra.mxu0 0.0
    %944 = vmatprep.subr.mxu0 0.0
    %945 = vmatpush2.xpose.msra.mxu0 0.0
    %946 = vmatprep.subr.mxu0 0.0
    %947 = vmatpush2.xpose.msra.mxu0 0.0
    %948 = vmatprep.subr.mxu0 0.0
    %949 = vmatpush2.xpose.msra.mxu0 0.0
    %950 = vmatprep.subr.mxu0 0.0
    %951 = vmatpush2.xpose.msra.mxu0 0.0
    %952 = vmatprep.subr.mxu0 0.0
    %953 = vmatpush2.xpose.msra.mxu0 0.0
    %954 = vmatprep.subr.mxu0 0.0
    %955 = vmatpush2.xpose.msra.mxu0 0.0
    %956 = vmatprep.subr.mxu0 0.0
    %957 = vmatpush2.xpose.msra.mxu0 0.0
    %958 = vmatprep.subr.mxu0 0.0
    %959 = vmatpush2.xpose.msra.mxu0 0.0
    %960 = vmatprep.subr.mxu0 0.0
    %961 = vmatpush2.xpose.msra.mxu0 0.0
    %962 = vmatprep.subr.mxu0 0.0
    %963 = vmatpush2.xpose.msra.mxu0 0.0
    %964 = vmatprep.mubr.f32.mxu0 0.0
    %v965 = vand.u32 %v577, 4294901760
    %966 = vmatmul.mubr.f32.gmra.mxu0 %v965
    %v967 = vpop.f32.mrf.mxu0
    %v968 = vadd.f32 %v891, %v967
    %v969 = vpop.f32.mrf.mxu0
    %970 = vdwg.mxu0
    %971 = vmatprep.subr.mxu0 0.0
    %972 = vmatpush1.xpose.msra.mxu0 0.0
    %973 = vmatprep.subr.mxu0 0.0
    %974 = vmatpush1.xpose.msra.mxu0 0.0
    %975 = vmatprep.subr.mxu0 0.0
    %976 = vmatpush1.xpose.msra.mxu0 0.0
    %977 = vmatprep.subr.mxu0 0.0
    %978 = vmatpush1.xpose.msra.mxu0 0.0
    %979 = vmatprep.subr.mxu0 0.0
    %980 = vmatpush1.xpose.msra.mxu0 0.0
    %981 = vmatprep.subr.mxu0 0.0
    %982 = vmatpush1.xpose.msra.mxu0 0.0
    %983 = vmatprep.subr.mxu0 0.0
    %984 = vmatpush1.xpose.msra.mxu0 0.0
    %985 = vmatprep.subr.mxu0 0.0
    %986 = vmatpush1.xpose.msra.mxu0 0.0
    %987 = vmatprep.subr.mxu0 0.0
    %988 = vmatpush1.xpose.msra.mxu0 0.0
    %989 = vmatprep.subr.mxu0 0.0
    %990 = vmatpush1.xpose.msra.mxu0 0.0
    %991 = vmatprep.subr.mxu0 0.0
    %992 = vmatpush1.xpose.msra.mxu0 0.0
    %993 = vmatprep.subr.mxu0 0.0
    %994 = vmatpush1.xpose.msra.mxu0 0.0
    %995 = vmatprep.subr.mxu0 0.0
    %996 = vmatpush1.xpose.msra.mxu0 0.0
    %997 = vmatprep.subr.mxu0 0.0
    %998 = vmatpush1.xpose.msra.mxu0 0.0
    %999 = vmatprep.subr.mxu0 0.0
    %v1000 = vand.u32 %v583, 4294901760
    %1001 = vmatpush1.xpose.msra.mxu0 %v1000
    %1002 = vmatprep.subr.mxu0 0.0
    %v1003 = vand.u32 %v580, 4294901760
    %1004 = vmatpush1.xpose.msra.mxu0 %v1003
    %1005 = vmatprep.subr.mxu0 0.0
    %1006 = vmatpush2.xpose.msra.mxu0 0.0
    %1007 = vmatprep.subr.mxu0 0.0
    %1008 = vmatpush2.xpose.msra.mxu0 0.0
    %1009 = vmatprep.subr.mxu0 0.0
    %1010 = vmatpush2.xpose.msra.mxu0 0.0
    %1011 = vmatprep.subr.mxu0 0.0
    %1012 = vmatpush2.xpose.msra.mxu0 0.0
    %1013 = vmatprep.subr.mxu0 0.0
    %1014 = vmatpush2.xpose.msra.mxu0 0.0
    %1015 = vmatprep.subr.mxu0 0.0
    %1016 = vmatpush2.xpose.msra.mxu0 0.0
    %1017 = vmatprep.subr.mxu0 0.0
    %1018 = vmatpush2.xpose.msra.mxu0 0.0
    %1019 = vmatprep.subr.mxu0 0.0
    %1020 = vmatpush2.xpose.msra.mxu0 0.0
    %1021 = vmatprep.subr.mxu0 0.0
    %1022 = vmatpush2.xpose.msra.mxu0 0.0
    %1023 = vmatprep.subr.mxu0 0.0
    %1024 = vmatpush2.xpose.msra.mxu0 0.0
    %1025 = vmatprep.subr.mxu0 0.0
    %1026 = vmatpush2.xpose.msra.mxu0 0.0
    %1027 = vmatprep.subr.mxu0 0.0
    %1028 = vmatpush2.xpose.msra.mxu0 0.0
    %1029 = vmatprep.subr.mxu0 0.0
    %1030 = vmatpush2.xpose.msra.mxu0 0.0
    %1031 = vmatprep.subr.mxu0 0.0
    %1032 = vmatpush2.xpose.msra.mxu0 0.0
    %1033 = vmatprep.subr.mxu0 0.0
    %1034 = vmatpush2.xpose.msra.mxu0 0.0
    %1035 = vmatprep.subr.mxu0 0.0
    %1036 = vmatpush2.xpose.msra.mxu0 0.0
    %1037 = vmatprep.mubr.f32.mxu0 0.0
    %v1038 = vand.u32 %v577, 4294901760
    %1039 = vmatmul.mubr.f32.gmra.mxu0 %v1038
    %v1040 = vpop.f32.mrf.mxu0
    %v1041 = vadd.f32 %v968, %v1040
    %v1042 = vpop.f32.mrf.mxu0
    %1043 = vdwg.mxu0
    %vm1044 = vcmask 122880
    %1045 = vst.msk [vmem:[#allocation8] sm:$0x1] %vm1044, %v1041
    // Predicated region
    $region30: #{nn_forward.1} parent=1 // pred_check
      _
    $region31: #{nn_forward.1} parent=1 // pred_check_branch
      %1047 = sbr.rel (0) target = $region33
    $region32: #{nn_forward.1} parent=1 // pred_region
      %s1049 = ssub.s32 16, 16
      %1050 = vsyncadd [#allocation5], %s1049
      %s1052 = sshll.u32 [#allocation8], 4
      %s1053 = int_to_ptr.vmem [resolvable:$true] %s1052
      %1055 = dma.vmem_to_hbm [thread:$0]  %s1053, 16, %s5, [#allocation5]
    $region33: #{nn_forward.1} parent=1 // pred_fallthru
      _
    // Predicated region
    $region34: #{nn_forward.1} parent=1 // pred_check
      _
    $region35: #{nn_forward.1} parent=1 // pred_check_branch
      %1057 = sbr.rel (0) target = $region37
    $region36: #{nn_forward.1} parent=1 // pred_region
      %1058 = dma.done [#allocation5], 16
    $region37: #{nn_forward.1} parent=1 // pred_fallthru
      _
    %1059 = vsyncpa [#allocation4], 1
    %1060 = vsyncpa [#allocation7], 1
    %1061 = vsyncpa [#allocation5], 1

</llo_original>
